<compile_context>
chip_gen: v6e
topology: v6e:2x2x1
jax: 0.10.0
libtpu: 0.0.40
codegen_flags: <defaults>
</compile_context>

<pallas_src>
import functools

import jax
import jax.numpy as jnp
import numpy as np
from jax.experimental import pallas as pl
from jax.experimental.pallas import tpu as pltpu


# -----------------------------------------------------------------------------
# Pallas kernel: whole balanced tree, level-batched
# -----------------------------------------------------------------------------
def _renn_tree_kernel(leaf_ref, wa_ref, wb_ref, b_ref, label_ref, noise_ref,
                      out_ref, loss_ref, v1_buf, v2_buf,
                      *, seq, n_neg, n_internal):
    """Compose every internal node of a perfect binary tree + accumulate NCE loss.

    leaf_ref  : (seq, d)               leaf embeddings (level 0)
    wa_ref    : (d, d)                 left half of Linear(2d, d) weight (pre-transposed)
    wb_ref    : (d, d)                 right half
    b_ref     : (1, d)                 bias
    label_ref : (n_internal, d)        label embedding per internal node (level order)
    noise_ref : (n_neg*n_internal, d)  noise embeddings, row = k*n_internal + node
    out_ref   : (n_internal, d)        composed vector per internal node (level order)
    loss_ref  : (1, 1)                 total NCE loss over all internal nodes
    v1_buf    : (seq//2, d) VMEM scratch  left-child operand for the current level
    v2_buf    : (seq//2, d) VMEM scratch  right-child operand for the current level
    """
    wa = wa_ref[...]
    wb = wb_ref[...]
    bias = b_ref[...]
    labels = label_ref[...]
    noise = noise_ref[...]

    cur = leaf_ref[...]            # (n_cur, d) vectors of the current level
    n_cur = seq
    node_off = 0                   # level-order index of the first node of this level
    total = jnp.zeros((1, 1), jnp.float32)

    # Tree depth is static -> this Python loop fully unrolls at trace time.
    while n_cur > 1:
        m = n_cur // 2

        # Gather even/odd rows into contiguous (m, d) operands via cheap static
        # per-row copies through VMEM scratch (robust on all TPU generations;
        # avoids strided value slices / unaligned concatenation).
        for j in range(m):
            v1_buf[j:j + 1, :] = cur[2 * j:2 * j + 1, :]
            v2_buf[j:j + 1, :] = cur[2 * j + 1:2 * j + 2, :]
        v1 = v1_buf[0:m, :]
        v2 = v2_buf[0:m, :]

        # Linear(2d -> d) over cat([v1, v2], dim=1), batched over the m nodes
        # of this level:  h = v1 @ Wa + v2 @ Wb + b.
        h = (jnp.dot(v1, wa, preferred_element_type=jnp.float32)
             + jnp.dot(v2, wb, preferred_element_type=jnp.float32)
             + bias)                                             # (m, d)

        # NCE loss for every node of this level: VPU multiply + lane reduce
        # (lane-major layout, no transposed noise matrix, no MXU round trip).
        lbl = labels[node_off:node_off + m, :]                   # (m, d)
        node_loss = jax.nn.sigmoid(
            jnp.sum(h * lbl, axis=-1, keepdims=True))            # (m, 1)
        for k in range(n_neg):
            row0 = k * n_internal + node_off
            nz = noise[row0:row0 + m, :]                         # (m, d)
            node_loss = node_loss + jax.nn.sigmoid(
                jnp.sum(h * nz, axis=-1, keepdims=True))
        total = total + jnp.sum(node_loss, axis=0, keepdims=True)   # (1, 1)

        # Lane/sublane-dense slab write of this level's node vectors.
        out_ref[node_off:node_off + m, :] = h

        cur = h
        node_off += m
        n_cur = m

    loss_ref[...] = total


# -----------------------------------------------------------------------------
# JAX wrapper: one jit = three gathers + one pallas_call
# -----------------------------------------------------------------------------
@jax.jit
def renn_forward(embed_w, noise_w, wa, wb, b, token_ids, label_ids, noise_ids):
    seq = token_ids.shape[0]
    d = embed_w.shape[1]
    n_internal = seq - 1
    n_neg = noise_ids.shape[1]

    # One gather each (instead of per-node gathers in Python glue).
    leaf_vecs = embed_w[token_ids]                               # (seq, d)
    label_vecs = embed_w[label_ids]                              # (n_internal, d)
    noise_vecs = noise_w[jnp.transpose(noise_ids).reshape(-1)]   # (n_neg*n_internal, d)

    vmem = pl.BlockSpec(memory_space=pltpu.MemorySpace.VMEM)
    kernel = functools.partial(_renn_tree_kernel, seq=seq, n_neg=n_neg,
                               n_internal=n_internal)
    node_vecs, loss = pl.pallas_call(
        kernel,
        out_shape=(jax.ShapeDtypeStruct((n_internal, d), jnp.float32),
                   jax.ShapeDtypeStruct((1, 1), jnp.float32)),
        in_specs=[vmem] * 6,
        out_specs=(vmem, vmem),
        scratch_shapes=[pltpu.VMEM((seq // 2, d), jnp.float32),
                        pltpu.VMEM((seq // 2, d), jnp.float32)],
    )(leaf_vecs, wa, wb, b, label_vecs, noise_vecs)

    root = node_vecs[n_internal - 1:n_internal, :]               # root = last internal node
    return root, node_vecs, loss


# -----------------------------------------------------------------------------
# Parameters (mirrors nn.Embedding x2 + nn.Linear(2d, d))
# -----------------------------------------------------------------------------
def make_params(key, vocab_size, d):
    k1, k2, k3, k4 = jax.random.split(key, 4)
    embed_w = jax.random.normal(k1, (vocab_size, d), jnp.float32) * 0.1   # nn.Embedding
    noise_w = jax.random.normal(k2, (vocab_size, d), jnp.float32) * 0.1   # nn.Embedding
    # nn.Linear(2d, d): torch weight is (d, 2d); split + transpose -> Wa, Wb so
    # that Linear(cat([v1, v2], dim=1)) == v1 @ Wa + v2 @ Wb + b.
    w_full = jax.random.normal(k3, (d, 2 * d), jnp.float32) * (1.0 / jnp.sqrt(2.0 * d))
    wa = jnp.transpose(w_full[:, :d])                                     # (d, d)
    wb = jnp.transpose(w_full[:, d:])                                     # (d, d)
    b = jax.random.normal(k4, (1, d), jnp.float32) * (1.0 / jnp.sqrt(2.0 * d))
    return embed_w, noise_w, wa, wb, b


# -----------------------------------------------------------------------------
# Pure-numpy reference (same level-order node numbering) for a correctness check
# -----------------------------------------------------------------------------
def renn_reference(embed_w, noise_w, wa, wb, b, token_ids, label_ids, noise_ids):
    embed_w = np.asarray(embed_w); noise_w = np.asarray(noise_w)
    wa = np.asarray(wa); wb = np.asarray(wb); b = np.asarray(b)
    token_ids = np.asarray(token_ids); label_ids = np.asarray(label_ids)
    noise_ids = np.asarray(noise_ids)

    def sig(x):
        return 1.0 / (1.0 + np.exp(-x))

    cur = embed_w[token_ids]
    labels = embed_w[label_ids]
    noise = noise_w[noise_ids]                 # (n_internal, n_neg, d)
    outs, total, node = [], 0.0, 0
    while cur.shape[0] > 1:
        h = cur[0::2] @ wa + cur[1::2] @ wb + b
        for j in range(h.shape[0]):
            lss = sig(float(np.dot(h[j], labels[node + j])))
            for k in range(noise.shape[1]):
                lss += sig(float(np.dot(h[j], noise[node + j, k])))
            total += lss
        outs.append(h)
        node += h.shape[0]
        cur = h
    return np.concatenate(outs, axis=0), np.float32(total)


if __name__ == "__main__":
    d = 32          # word-vector dimension
    vocab_size = 64
    n_neg = 4       # negative samples per node
    seq = 8         # leaves of the balanced binary tree -> 7 internal nodes
    assert seq >= 2 and (seq & (seq - 1)) == 0, "balanced tree needs power-of-two leaves"

    key = jax.random.PRNGKey(0)
    kp, kt, kl, kn = jax.random.split(key, 4)
    embed_w, noise_w, wa, wb, b = make_params(kp, vocab_size, d)

    n_internal = seq - 1
    # Deterministic "sentence" + stand-ins for getRandomLabel / np.random.choice.
    token_ids = jax.random.randint(kt, (seq,), 0, vocab_size)
    label_ids = jax.random.randint(kl, (n_internal,), 0, vocab_size)
    noise_ids = jax.random.randint(kn, (n_internal, n_neg), 0, vocab_size)

    root, node_vecs, loss = renn_forward(embed_w, noise_w, wa, wb, b,
                                         token_ids, label_ids, noise_ids)
    jax.block_until_ready(root)
    jax.block_until_ready(node_vecs)
    jax.block_until_ready(loss)

    # Verify against a pure-numpy reference of the same forward pass.
    ref_nodes, ref_loss = renn_reference(embed_w, noise_w, wa, wb, b,
                                         token_ids, label_ids, noise_ids)
    nodes_ok = np.allclose(np.asarray(node_vecs), ref_nodes, rtol=1e-3, atol=1e-3)
    loss_ok = np.allclose(float(np.asarray(loss)[0, 0]), float(ref_loss),
                          rtol=1e-3, atol=1e-3)
    if not (nodes_ok and loss_ok):
        raise SystemExit(f"mismatch vs reference: nodes_ok={nodes_ok} loss_ok={loss_ok}")

    # TODO(synk): the `recursive=True` nn.LSTM composition branch of ReNN is not
    # implemented; only the Linear(2d, d) composition path (recursive=False) is covered.
    print("KERNEL_OK")
</pallas_src>

<mosaic_0001>
module attributes {stable_mosaic.version = 11 : i64} {
  func.func @_renn_tree_kernel(%arg0: memref<8x32xf32, #tpu.memory_space<vmem>>, %arg1: memref<32x32xf32, #tpu.memory_space<vmem>>, %arg2: memref<32x32xf32, #tpu.memory_space<vmem>>, %arg3: memref<1x32xf32, #tpu.memory_space<vmem>>, %arg4: memref<7x32xf32, #tpu.memory_space<vmem>>, %arg5: memref<28x32xf32, #tpu.memory_space<vmem>>, %arg6: memref<7x32xf32, #tpu.memory_space<vmem>>, %arg7: memref<1x1xf32, #tpu.memory_space<vmem>>, %arg8: memref<4x32xf32, #tpu.memory_space<vmem>>, %arg9: memref<4x32xf32, #tpu.memory_space<vmem>>) attributes {dimension_semantics = [], scalar_prefetch = 0 : i64, scratch_operands = 2 : i64, tpu.core_type = #tpu.core_type<tc>} {
    %c0 = arith.constant 0 : index
    %c0_0 = arith.constant 0 : index
    %0 = vector.load %arg1[%c0, %c0_0] : memref<32x32xf32, #tpu.memory_space<vmem>>, vector<32x32xf32>
    %c0_1 = arith.constant 0 : index
    %c0_2 = arith.constant 0 : index
    %1 = vector.load %arg2[%c0_1, %c0_2] : memref<32x32xf32, #tpu.memory_space<vmem>>, vector<32x32xf32>
    %c0_3 = arith.constant 0 : index
    %c0_4 = arith.constant 0 : index
    %2 = vector.load %arg3[%c0_3, %c0_4] : memref<1x32xf32, #tpu.memory_space<vmem>>, vector<1x32xf32>
    %c0_5 = arith.constant 0 : index
    %c0_6 = arith.constant 0 : index
    %3 = vector.load %arg4[%c0_5, %c0_6] : memref<7x32xf32, #tpu.memory_space<vmem>>, vector<7x32xf32>
    %c0_7 = arith.constant 0 : index
    %c0_8 = arith.constant 0 : index
    %4 = vector.load %arg5[%c0_7, %c0_8] : memref<28x32xf32, #tpu.memory_space<vmem>>, vector<28x32xf32>
    %c0_9 = arith.constant 0 : index
    %c0_10 = arith.constant 0 : index
    %5 = vector.load %arg0[%c0_9, %c0_10] : memref<8x32xf32, #tpu.memory_space<vmem>>, vector<8x32xf32>
    %cst = arith.constant 0.000000e+00 : f32
    %6 = vector.broadcast %cst : f32 to vector<1x1xf32>
    %7 = vector.extract_strided_slice %5 {offsets = [0, 0], sizes = [1, 32], strides = [1, 1]} : vector<8x32xf32> to vector<1x32xf32>
    %c0_11 = arith.constant 0 : index
    %c0_12 = arith.constant 0 : index
    %8 = vector.load %arg8[%c0_11, %c0_12] : memref<4x32xf32, #tpu.memory_space<vmem>>, vector<1x32xf32>
    tpu.vector_store %arg8[%c0_11, %c0_12], %7 {strides = array<i32>} : memref<4x32xf32, #tpu.memory_space<vmem>>, vector<1x32xf32>,
    %9 = vector.extract_strided_slice %5 {offsets = [1, 0], sizes = [1, 32], strides = [1, 1]} : vector<8x32xf32> to vector<1x32xf32>
    %c0_13 = arith.constant 0 : index
    %c0_14 = arith.constant 0 : index
    %10 = vector.load %arg9[%c0_13, %c0_14] : memref<4x32xf32, #tpu.memory_space<vmem>>, vector<1x32xf32>
    tpu.vector_store %arg9[%c0_13, %c0_14], %9 {strides = array<i32>} : memref<4x32xf32, #tpu.memory_space<vmem>>, vector<1x32xf32>,
    %11 = vector.extract_strided_slice %5 {offsets = [2, 0], sizes = [1, 32], strides = [1, 1]} : vector<8x32xf32> to vector<1x32xf32>
    %c1 = arith.constant 1 : index
    %c0_15 = arith.constant 0 : index
    %12 = vector.load %arg8[%c1, %c0_15] : memref<4x32xf32, #tpu.memory_space<vmem>>, vector<1x32xf32>
    tpu.vector_store %arg8[%c1, %c0_15], %11 {strides = array<i32>} : memref<4x32xf32, #tpu.memory_space<vmem>>, vector<1x32xf32>,
    %13 = vector.extract_strided_slice %5 {offsets = [3, 0], sizes = [1, 32], strides = [1, 1]} : vector<8x32xf32> to vector<1x32xf32>
    %c1_16 = arith.constant 1 : index
    %c0_17 = arith.constant 0 : index
    %14 = vector.load %arg9[%c1_16, %c0_17] : memref<4x32xf32, #tpu.memory_space<vmem>>, vector<1x32xf32>
    tpu.vector_store %arg9[%c1_16, %c0_17], %13 {strides = array<i32>} : memref<4x32xf32, #tpu.memory_space<vmem>>, vector<1x32xf32>,
    %15 = vector.extract_strided_slice %5 {offsets = [4, 0], sizes = [1, 32], strides = [1, 1]} : vector<8x32xf32> to vector<1x32xf32>
    %c2 = arith.constant 2 : index
    %c0_18 = arith.constant 0 : index
    %16 = vector.load %arg8[%c2, %c0_18] : memref<4x32xf32, #tpu.memory_space<vmem>>, vector<1x32xf32>
    tpu.vector_store %arg8[%c2, %c0_18], %15 {strides = array<i32>} : memref<4x32xf32, #tpu.memory_space<vmem>>, vector<1x32xf32>,
    %17 = vector.extract_strided_slice %5 {offsets = [5, 0], sizes = [1, 32], strides = [1, 1]} : vector<8x32xf32> to vector<1x32xf32>
    %c2_19 = arith.constant 2 : index
    %c0_20 = arith.constant 0 : index
    %18 = vector.load %arg9[%c2_19, %c0_20] : memref<4x32xf32, #tpu.memory_space<vmem>>, vector<1x32xf32>
    tpu.vector_store %arg9[%c2_19, %c0_20], %17 {strides = array<i32>} : memref<4x32xf32, #tpu.memory_space<vmem>>, vector<1x32xf32>,
    %19 = vector.extract_strided_slice %5 {offsets = [6, 0], sizes = [1, 32], strides = [1, 1]} : vector<8x32xf32> to vector<1x32xf32>
    %c3 = arith.constant 3 : index
    %c0_21 = arith.constant 0 : index
    %20 = vector.load %arg8[%c3, %c0_21] : memref<4x32xf32, #tpu.memory_space<vmem>>, vector<1x32xf32>
    tpu.vector_store %arg8[%c3, %c0_21], %19 {strides = array<i32>} : memref<4x32xf32, #tpu.memory_space<vmem>>, vector<1x32xf32>,
    %21 = vector.extract_strided_slice %5 {offsets = [7, 0], sizes = [1, 32], strides = [1, 1]} : vector<8x32xf32> to vector<1x32xf32>
    %c3_22 = arith.constant 3 : index
    %c0_23 = arith.constant 0 : index
    %22 = vector.load %arg9[%c3_22, %c0_23] : memref<4x32xf32, #tpu.memory_space<vmem>>, vector<1x32xf32>
    tpu.vector_store %arg9[%c3_22, %c0_23], %21 {strides = array<i32>} : memref<4x32xf32, #tpu.memory_space<vmem>>, vector<1x32xf32>,
    %c0_24 = arith.constant 0 : index
    %c0_25 = arith.constant 0 : index
    %23 = vector.load %arg8[%c0_24, %c0_25] : memref<4x32xf32, #tpu.memory_space<vmem>>, vector<4x32xf32>
    %c0_26 = arith.constant 0 : index
    %c0_27 = arith.constant 0 : index
    %24 = vector.load %arg9[%c0_26, %c0_27] : memref<4x32xf32, #tpu.memory_space<vmem>>, vector<4x32xf32>
    %cst_28 = arith.constant dense<0.000000e+00> : vector<4x32xf32>
    %25 = tpu.matmul %23, %0, %cst_28 {dimension_numbers = #tpu.dot_dimension_numbers<[1], [0], [0], [1], [0, 0, 1, 1], [], []>} : vector<4x32xf32>, vector<32x32xf32>, vector<4x32xf32> -> vector<4x32xf32>
    %cst_29 = arith.constant dense<0.000000e+00> : vector<4x32xf32>
    %26 = tpu.matmul %24, %1, %cst_29 {dimension_numbers = #tpu.dot_dimension_numbers<[1], [0], [0], [1], [0, 0, 1, 1], [], []>} : vector<4x32xf32>, vector<32x32xf32>, vector<4x32xf32> -> vector<4x32xf32>
    %27 = arith.addf %25, %26 : vector<4x32xf32>
    %28 = vector.broadcast %2 : vector<1x32xf32> to vector<4x32xf32>
    %29 = arith.addf %27, %28 : vector<4x32xf32>
    %30 = vector.extract_strided_slice %3 {offsets = [0, 0], sizes = [4, 32], strides = [1, 1]} : vector<7x32xf32> to vector<4x32xf32>
    %31 = arith.mulf %29, %30 : vector<4x32xf32>
    %cst_30 = arith.constant dense<0.000000e+00> : vector<4xf32>
    %32 = vector.multi_reduction <add>, %31, %cst_30 [1] : vector<4x32xf32> to vector<4xf32>
    %33 = vector.shape_cast %32 : vector<4xf32> to vector<4x1xf32>
    %34 = arith.negf %33 : vector<4x1xf32>
    %35 = math.exp %34 : vector<4x1xf32>
    %cst_31 = arith.constant 1.000000e+00 : f32
    %36 = vector.broadcast %cst_31 : f32 to vector<4x1xf32>
    %37 = arith.addf %36, %35 : vector<4x1xf32>
    %38 = arith.divf %36, %37 : vector<4x1xf32>
    %39 = vector.extract_strided_slice %4 {offsets = [0, 0], sizes = [4, 32], strides = [1, 1]} : vector<28x32xf32> to vector<4x32xf32>
    %40 = arith.mulf %29, %39 : vector<4x32xf32>
    %cst_32 = arith.constant dense<0.000000e+00> : vector<4xf32>
    %41 = vector.multi_reduction <add>, %40, %cst_32 [1] : vector<4x32xf32> to vector<4xf32>
    %42 = vector.shape_cast %41 : vector<4xf32> to vector<4x1xf32>
    %43 = arith.negf %42 : vector<4x1xf32>
    %44 = math.exp %43 : vector<4x1xf32>
    %cst_33 = arith.constant 1.000000e+00 : f32
    %45 = vector.broadcast %cst_33 : f32 to vector<4x1xf32>
    %46 = arith.addf %45, %44 : vector<4x1xf32>
    %47 = arith.divf %45, %46 : vector<4x1xf32>
    %48 = arith.addf %38, %47 : vector<4x1xf32>
    %49 = vector.extract_strided_slice %4 {offsets = [7, 0], sizes = [4, 32], strides = [1, 1]} : vector<28x32xf32> to vector<4x32xf32>
    %50 = arith.mulf %29, %49 : vector<4x32xf32>
    %cst_34 = arith.constant dense<0.000000e+00> : vector<4xf32>
    %51 = vector.multi_reduction <add>, %50, %cst_34 [1] : vector<4x32xf32> to vector<4xf32>
    %52 = vector.shape_cast %51 : vector<4xf32> to vector<4x1xf32>
    %53 = arith.negf %52 : vector<4x1xf32>
    %54 = math.exp %53 : vector<4x1xf32>
    %cst_35 = arith.constant 1.000000e+00 : f32
    %55 = vector.broadcast %cst_35 : f32 to vector<4x1xf32>
    %56 = arith.addf %55, %54 : vector<4x1xf32>
    %57 = arith.divf %55, %56 : vector<4x1xf32>
    %58 = arith.addf %48, %57 : vector<4x1xf32>
    %59 = vector.extract_strided_slice %4 {offsets = [14, 0], sizes = [4, 32], strides = [1, 1]} : vector<28x32xf32> to vector<4x32xf32>
    %60 = arith.mulf %29, %59 : vector<4x32xf32>
    %cst_36 = arith.constant dense<0.000000e+00> : vector<4xf32>
    %61 = vector.multi_reduction <add>, %60, %cst_36 [1] : vector<4x32xf32> to vector<4xf32>
    %62 = vector.shape_cast %61 : vector<4xf32> to vector<4x1xf32>
    %63 = arith.negf %62 : vector<4x1xf32>
    %64 = math.exp %63 : vector<4x1xf32>
    %cst_37 = arith.constant 1.000000e+00 : f32
    %65 = vector.broadcast %cst_37 : f32 to vector<4x1xf32>
    %66 = arith.addf %65, %64 : vector<4x1xf32>
    %67 = arith.divf %65, %66 : vector<4x1xf32>
    %68 = arith.addf %58, %67 : vector<4x1xf32>
    %69 = vector.extract_strided_slice %4 {offsets = [21, 0], sizes = [4, 32], strides = [1, 1]} : vector<28x32xf32> to vector<4x32xf32>
    %70 = arith.mulf %29, %69 : vector<4x32xf32>
    %cst_38 = arith.constant dense<0.000000e+00> : vector<4xf32>
    %71 = vector.multi_reduction <add>, %70, %cst_38 [1] : vector<4x32xf32> to vector<4xf32>
    %72 = vector.shape_cast %71 : vector<4xf32> to vector<4x1xf32>
    %73 = arith.negf %72 : vector<4x1xf32>
    %74 = math.exp %73 : vector<4x1xf32>
    %cst_39 = arith.constant 1.000000e+00 : f32
    %75 = vector.broadcast %cst_39 : f32 to vector<4x1xf32>
    %76 = arith.addf %75, %74 : vector<4x1xf32>
    %77 = arith.divf %75, %76 : vector<4x1xf32>
    %78 = arith.addf %68, %77 : vector<4x1xf32>
    %cst_40 = arith.constant dense<0.000000e+00> : vector<1xf32>
    %79 = vector.multi_reduction <add>, %78, %cst_40 [0] : vector<4x1xf32> to vector<1xf32>
    %80 = vector.shape_cast %79 : vector<1xf32> to vector<1x1xf32>
    %81 = arith.addf %6, %80 : vector<1x1xf32>
    %c0_41 = arith.constant 0 : index
    %c0_42 = arith.constant 0 : index
    %82 = vector.load %arg6[%c0_41, %c0_42] : memref<7x32xf32, #tpu.memory_space<vmem>>, vector<4x32xf32>
    tpu.vector_store %arg6[%c0_41, %c0_42], %29 {strides = array<i32>} : memref<7x32xf32, #tpu.memory_space<vmem>>, vector<4x32xf32>,
    %83 = vector.extract_strided_slice %29 {offsets = [0, 0], sizes = [1, 32], strides = [1, 1]} : vector<4x32xf32> to vector<1x32xf32>
    %c0_43 = arith.constant 0 : index
    %c0_44 = arith.constant 0 : index
    %84 = vector.load %arg8[%c0_43, %c0_44] : memref<4x32xf32, #tpu.memory_space<vmem>>, vector<1x32xf32>
    tpu.vector_store %arg8[%c0_43, %c0_44], %83 {strides = array<i32>} : memref<4x32xf32, #tpu.memory_space<vmem>>, vector<1x32xf32>,
    %85 = vector.extract_strided_slice %29 {offsets = [1, 0], sizes = [1, 32], strides = [1, 1]} : vector<4x32xf32> to vector<1x32xf32>
    %c0_45 = arith.constant 0 : index
    %c0_46 = arith.constant 0 : index
    %86 = vector.load %arg9[%c0_45, %c0_46] : memref<4x32xf32, #tpu.memory_space<vmem>>, vector<1x32xf32>
    tpu.vector_store %arg9[%c0_45, %c0_46], %85 {strides = array<i32>} : memref<4x32xf32, #tpu.memory_space<vmem>>, vector<1x32xf32>,
    %87 = vector.extract_strided_slice %29 {offsets = [2, 0], sizes = [1, 32], strides = [1, 1]} : vector<4x32xf32> to vector<1x32xf32>
    %c1_47 = arith.constant 1 : index
    %c0_48 = arith.constant 0 : index
    %88 = vector.load %arg8[%c1_47, %c0_48] : memref<4x32xf32, #tpu.memory_space<vmem>>, vector<1x32xf32>
    tpu.vector_store %arg8[%c1_47, %c0_48], %87 {strides = array<i32>} : memref<4x32xf32, #tpu.memory_space<vmem>>, vector<1x32xf32>,
    %89 = vector.extract_strided_slice %29 {offsets = [3, 0], sizes = [1, 32], strides = [1, 1]} : vector<4x32xf32> to vector<1x32xf32>
    %c1_49 = arith.constant 1 : index
    %c0_50 = arith.constant 0 : index
    %90 = vector.load %arg9[%c1_49, %c0_50] : memref<4x32xf32, #tpu.memory_space<vmem>>, vector<1x32xf32>
    tpu.vector_store %arg9[%c1_49, %c0_50], %89 {strides = array<i32>} : memref<4x32xf32, #tpu.memory_space<vmem>>, vector<1x32xf32>,
    %c0_51 = arith.constant 0 : index
    %c0_52 = arith.constant 0 : index
    %91 = vector.load %arg8[%c0_51, %c0_52] : memref<4x32xf32, #tpu.memory_space<vmem>>, vector<2x32xf32>
    %c0_53 = arith.constant 0 : index
    %c0_54 = arith.constant 0 : index
    %92 = vector.load %arg9[%c0_53, %c0_54] : memref<4x32xf32, #tpu.memory_space<vmem>>, vector<2x32xf32>
    %cst_55 = arith.constant dense<0.000000e+00> : vector<2x32xf32>
    %93 = tpu.matmul %91, %0, %cst_55 {dimension_numbers = #tpu.dot_dimension_numbers<[1], [0], [0], [1], [0, 0, 1, 1], [], []>} : vector<2x32xf32>, vector<32x32xf32>, vector<2x32xf32> -> vector<2x32xf32>
    %cst_56 = arith.constant dense<0.000000e+00> : vector<2x32xf32>
    %94 = tpu.matmul %92, %1, %cst_56 {dimension_numbers = #tpu.dot_dimension_numbers<[1], [0], [0], [1], [0, 0, 1, 1], [], []>} : vector<2x32xf32>, vector<32x32xf32>, vector<2x32xf32> -> vector<2x32xf32>
    %95 = arith.addf %93, %94 : vector<2x32xf32>
    %96 = vector.broadcast %2 : vector<1x32xf32> to vector<2x32xf32>
    %97 = arith.addf %95, %96 : vector<2x32xf32>
    %98 = vector.extract_strided_slice %3 {offsets = [4, 0], sizes = [2, 32], strides = [1, 1]} : vector<7x32xf32> to vector<2x32xf32>
    %99 = arith.mulf %97, %98 : vector<2x32xf32>
    %cst_57 = arith.constant dense<0.000000e+00> : vector<2xf32>
    %100 = vector.multi_reduction <add>, %99, %cst_57 [1] : vector<2x32xf32> to vector<2xf32>
    %101 = vector.shape_cast %100 : vector<2xf32> to vector<2x1xf32>
    %102 = arith.negf %101 : vector<2x1xf32>
    %103 = math.exp %102 : vector<2x1xf32>
    %cst_58 = arith.constant 1.000000e+00 : f32
    %104 = vector.broadcast %cst_58 : f32 to vector<2x1xf32>
    %105 = arith.addf %104, %103 : vector<2x1xf32>
    %106 = arith.divf %104, %105 : vector<2x1xf32>
    %107 = vector.extract_strided_slice %4 {offsets = [4, 0], sizes = [2, 32], strides = [1, 1]} : vector<28x32xf32> to vector<2x32xf32>
    %108 = arith.mulf %97, %107 : vector<2x32xf32>
    %cst_59 = arith.constant dense<0.000000e+00> : vector<2xf32>
    %109 = vector.multi_reduction <add>, %108, %cst_59 [1] : vector<2x32xf32> to vector<2xf32>
    %110 = vector.shape_cast %109 : vector<2xf32> to vector<2x1xf32>
    %111 = arith.negf %110 : vector<2x1xf32>
    %112 = math.exp %111 : vector<2x1xf32>
    %cst_60 = arith.constant 1.000000e+00 : f32
    %113 = vector.broadcast %cst_60 : f32 to vector<2x1xf32>
    %114 = arith.addf %113, %112 : vector<2x1xf32>
    %115 = arith.divf %113, %114 : vector<2x1xf32>
    %116 = arith.addf %106, %115 : vector<2x1xf32>
    %117 = vector.extract_strided_slice %4 {offsets = [11, 0], sizes = [2, 32], strides = [1, 1]} : vector<28x32xf32> to vector<2x32xf32>
    %118 = arith.mulf %97, %117 : vector<2x32xf32>
    %cst_61 = arith.constant dense<0.000000e+00> : vector<2xf32>
    %119 = vector.multi_reduction <add>, %118, %cst_61 [1] : vector<2x32xf32> to vector<2xf32>
    %120 = vector.shape_cast %119 : vector<2xf32> to vector<2x1xf32>
    %121 = arith.negf %120 : vector<2x1xf32>
    %122 = math.exp %121 : vector<2x1xf32>
    %cst_62 = arith.constant 1.000000e+00 : f32
    %123 = vector.broadcast %cst_62 : f32 to vector<2x1xf32>
    %124 = arith.addf %123, %122 : vector<2x1xf32>
    %125 = arith.divf %123, %124 : vector<2x1xf32>
    %126 = arith.addf %116, %125 : vector<2x1xf32>
    %127 = vector.extract_strided_slice %4 {offsets = [18, 0], sizes = [2, 32], strides = [1, 1]} : vector<28x32xf32> to vector<2x32xf32>
    %128 = arith.mulf %97, %127 : vector<2x32xf32>
    %cst_63 = arith.constant dense<0.000000e+00> : vector<2xf32>
    %129 = vector.multi_reduction <add>, %128, %cst_63 [1] : vector<2x32xf32> to vector<2xf32>
    %130 = vector.shape_cast %129 : vector<2xf32> to vector<2x1xf32>
    %131 = arith.negf %130 : vector<2x1xf32>
    %132 = math.exp %131 : vector<2x1xf32>
    %cst_64 = arith.constant 1.000000e+00 : f32
    %133 = vector.broadcast %cst_64 : f32 to vector<2x1xf32>
    %134 = arith.addf %133, %132 : vector<2x1xf32>
    %135 = arith.divf %133, %134 : vector<2x1xf32>
    %136 = arith.addf %126, %135 : vector<2x1xf32>
    %137 = vector.extract_strided_slice %4 {offsets = [25, 0], sizes = [2, 32], strides = [1, 1]} : vector<28x32xf32> to vector<2x32xf32>
    %138 = arith.mulf %97, %137 : vector<2x32xf32>
    %cst_65 = arith.constant dense<0.000000e+00> : vector<2xf32>
    %139 = vector.multi_reduction <add>, %138, %cst_65 [1] : vector<2x32xf32> to vector<2xf32>
    %140 = vector.shape_cast %139 : vector<2xf32> to vector<2x1xf32>
    %141 = arith.negf %140 : vector<2x1xf32>
    %142 = math.exp %141 : vector<2x1xf32>
    %cst_66 = arith.constant 1.000000e+00 : f32
    %143 = vector.broadcast %cst_66 : f32 to vector<2x1xf32>
    %144 = arith.addf %143, %142 : vector<2x1xf32>
    %145 = arith.divf %143, %144 : vector<2x1xf32>
    %146 = arith.addf %136, %145 : vector<2x1xf32>
    %cst_67 = arith.constant dense<0.000000e+00> : vector<1xf32>
    %147 = vector.multi_reduction <add>, %146, %cst_67 [0] : vector<2x1xf32> to vector<1xf32>
    %148 = vector.shape_cast %147 : vector<1xf32> to vector<1x1xf32>
    %149 = arith.addf %81, %148 : vector<1x1xf32>
    %c4 = arith.constant 4 : index
    %c0_68 = arith.constant 0 : index
    %150 = vector.load %arg6[%c4, %c0_68] : memref<7x32xf32, #tpu.memory_space<vmem>>, vector<2x32xf32>
    tpu.vector_store %arg6[%c4, %c0_68], %97 {strides = array<i32>} : memref<7x32xf32, #tpu.memory_space<vmem>>, vector<2x32xf32>,
    %151 = vector.extract_strided_slice %97 {offsets = [0, 0], sizes = [1, 32], strides = [1, 1]} : vector<2x32xf32> to vector<1x32xf32>
    %c0_69 = arith.constant 0 : index
    %c0_70 = arith.constant 0 : index
    %152 = vector.load %arg8[%c0_69, %c0_70] : memref<4x32xf32, #tpu.memory_space<vmem>>, vector<1x32xf32>
    tpu.vector_store %arg8[%c0_69, %c0_70], %151 {strides = array<i32>} : memref<4x32xf32, #tpu.memory_space<vmem>>, vector<1x32xf32>,
    %153 = vector.extract_strided_slice %97 {offsets = [1, 0], sizes = [1, 32], strides = [1, 1]} : vector<2x32xf32> to vector<1x32xf32>
    %c0_71 = arith.constant 0 : index
    %c0_72 = arith.constant 0 : index
    %154 = vector.load %arg9[%c0_71, %c0_72] : memref<4x32xf32, #tpu.memory_space<vmem>>, vector<1x32xf32>
    tpu.vector_store %arg9[%c0_71, %c0_72], %153 {strides = array<i32>} : memref<4x32xf32, #tpu.memory_space<vmem>>, vector<1x32xf32>,
    %c0_73 = arith.constant 0 : index
    %c0_74 = arith.constant 0 : index
    %155 = vector.load %arg8[%c0_73, %c0_74] : memref<4x32xf32, #tpu.memory_space<vmem>>, vector<1x32xf32>
    %c0_75 = arith.constant 0 : index
    %c0_76 = arith.constant 0 : index
    %156 = vector.load %arg9[%c0_75, %c0_76] : memref<4x32xf32, #tpu.memory_space<vmem>>, vector<1x32xf32>
    %cst_77 = arith.constant dense<0.000000e+00> : vector<1x32xf32>
    %157 = tpu.matmul %155, %0, %cst_77 {dimension_numbers = #tpu.dot_dimension_numbers<[1], [0], [0], [1], [0, 0, 1, 1], [], []>} : vector<1x32xf32>, vector<32x32xf32>, vector<1x32xf32> -> vector<1x32xf32>
    %cst_78 = arith.constant dense<0.000000e+00> : vector<1x32xf32>
    %158 = tpu.matmul %156, %1, %cst_78 {dimension_numbers = #tpu.dot_dimension_numbers<[1], [0], [0], [1], [0, 0, 1, 1], [], []>} : vector<1x32xf32>, vector<32x32xf32>, vector<1x32xf32> -> vector<1x32xf32>
    %159 = arith.addf %157, %158 : vector<1x32xf32>
    %160 = arith.addf %159, %2 : vector<1x32xf32>
    %161 = vector.extract_strided_slice %3 {offsets = [6, 0], sizes = [1, 32], strides = [1, 1]} : vector<7x32xf32> to vector<1x32xf32>
    %162 = arith.mulf %160, %161 : vector<1x32xf32>
    %cst_79 = arith.constant dense<0.000000e+00> : vector<1xf32>
    %163 = vector.multi_reduction <add>, %162, %cst_79 [1] : vector<1x32xf32> to vector<1xf32>
    %164 = vector.shape_cast %163 : vector<1xf32> to vector<1x1xf32>
    %165 = arith.negf %164 : vector<1x1xf32>
    %166 = math.exp %165 : vector<1x1xf32>
    %cst_80 = arith.constant 1.000000e+00 : f32
    %167 = vector.broadcast %cst_80 : f32 to vector<1x1xf32>
    %168 = arith.addf %167, %166 : vector<1x1xf32>
    %169 = arith.divf %167, %168 : vector<1x1xf32>
    %170 = vector.extract_strided_slice %4 {offsets = [6, 0], sizes = [1, 32], strides = [1, 1]} : vector<28x32xf32> to vector<1x32xf32>
    %171 = arith.mulf %160, %170 : vector<1x32xf32>
    %cst_81 = arith.constant dense<0.000000e+00> : vector<1xf32>
    %172 = vector.multi_reduction <add>, %171, %cst_81 [1] : vector<1x32xf32> to vector<1xf32>
    %173 = vector.shape_cast %172 : vector<1xf32> to vector<1x1xf32>
    %174 = arith.negf %173 : vector<1x1xf32>
    %175 = math.exp %174 : vector<1x1xf32>
    %cst_82 = arith.constant 1.000000e+00 : f32
    %176 = vector.broadcast %cst_82 : f32 to vector<1x1xf32>
    %177 = arith.addf %176, %175 : vector<1x1xf32>
    %178 = arith.divf %176, %177 : vector<1x1xf32>
    %179 = arith.addf %169, %178 : vector<1x1xf32>
    %180 = vector.extract_strided_slice %4 {offsets = [13, 0], sizes = [1, 32], strides = [1, 1]} : vector<28x32xf32> to vector<1x32xf32>
    %181 = arith.mulf %160, %180 : vector<1x32xf32>
    %cst_83 = arith.constant dense<0.000000e+00> : vector<1xf32>
    %182 = vector.multi_reduction <add>, %181, %cst_83 [1] : vector<1x32xf32> to vector<1xf32>
    %183 = vector.shape_cast %182 : vector<1xf32> to vector<1x1xf32>
    %184 = arith.negf %183 : vector<1x1xf32>
    %185 = math.exp %184 : vector<1x1xf32>
    %cst_84 = arith.constant 1.000000e+00 : f32
    %186 = vector.broadcast %cst_84 : f32 to vector<1x1xf32>
    %187 = arith.addf %186, %185 : vector<1x1xf32>
    %188 = arith.divf %186, %187 : vector<1x1xf32>
    %189 = arith.addf %179, %188 : vector<1x1xf32>
    %190 = vector.extract_strided_slice %4 {offsets = [20, 0], sizes = [1, 32], strides = [1, 1]} : vector<28x32xf32> to vector<1x32xf32>
    %191 = arith.mulf %160, %190 : vector<1x32xf32>
    %cst_85 = arith.constant dense<0.000000e+00> : vector<1xf32>
    %192 = vector.multi_reduction <add>, %191, %cst_85 [1] : vector<1x32xf32> to vector<1xf32>
    %193 = vector.shape_cast %192 : vector<1xf32> to vector<1x1xf32>
    %194 = arith.negf %193 : vector<1x1xf32>
    %195 = math.exp %194 : vector<1x1xf32>
    %cst_86 = arith.constant 1.000000e+00 : f32
    %196 = vector.broadcast %cst_86 : f32 to vector<1x1xf32>
    %197 = arith.addf %196, %195 : vector<1x1xf32>
    %198 = arith.divf %196, %197 : vector<1x1xf32>
    %199 = arith.addf %189, %198 : vector<1x1xf32>
    %200 = vector.extract_strided_slice %4 {offsets = [27, 0], sizes = [1, 32], strides = [1, 1]} : vector<28x32xf32> to vector<1x32xf32>
    %201 = arith.mulf %160, %200 : vector<1x32xf32>
    %cst_87 = arith.constant dense<0.000000e+00> : vector<1xf32>
    %202 = vector.multi_reduction <add>, %201, %cst_87 [1] : vector<1x32xf32> to vector<1xf32>
    %203 = vector.shape_cast %202 : vector<1xf32> to vector<1x1xf32>
    %204 = arith.negf %203 : vector<1x1xf32>
    %205 = math.exp %204 : vector<1x1xf32>
    %cst_88 = arith.constant 1.000000e+00 : f32
    %206 = vector.broadcast %cst_88 : f32 to vector<1x1xf32>
    %207 = arith.addf %206, %205 : vector<1x1xf32>
    %208 = arith.divf %206, %207 : vector<1x1xf32>
    %209 = arith.addf %199, %208 : vector<1x1xf32>
    %cst_89 = arith.constant dense<0.000000e+00> : vector<1xf32>
    %210 = vector.multi_reduction <add>, %209, %cst_89 [0] : vector<1x1xf32> to vector<1xf32>
    %211 = vector.shape_cast %210 : vector<1xf32> to vector<1x1xf32>
    %212 = arith.addf %149, %211 : vector<1x1xf32>
    %c6 = arith.constant 6 : index
    %c0_90 = arith.constant 0 : index
    %213 = vector.load %arg6[%c6, %c0_90] : memref<7x32xf32, #tpu.memory_space<vmem>>, vector<1x32xf32>
    tpu.vector_store %arg6[%c6, %c0_90], %160 {strides = array<i32>} : memref<7x32xf32, #tpu.memory_space<vmem>>, vector<1x32xf32>,
    %c0_91 = arith.constant 0 : index
    %c0_92 = arith.constant 0 : index
    %214 = vector.load %arg7[%c0_91, %c0_92] : memref<1x1xf32, #tpu.memory_space<vmem>>, vector<1x1xf32>
    tpu.vector_store %arg7[%c0_91, %c0_92], %212 {strides = array<i32>} : memref<1x1xf32, #tpu.memory_space<vmem>>, vector<1x1xf32>,
    return
  }
}

</mosaic_0001>

<llo_original>
// kernel: renn_forward.1
$region0: #{renn_forward.1}
  #allocation0 [shape = 'u32[]', space=smem, size = 0x4, offset = 0x4, fixed_abs, tag = 'smem constant byte address 0x4 - core index']
  #allocation1 [shape = 'u32[144,128]{1,0:T(1,128)}', space=vmem, size = 0x12000, scoped, tag = 'internal scratch']
  #allocation2 [shape = 'f32[4,32]{1,0:T(4,128)}', space=vmem, size = 0x800, scoped, tag = 'scratch operand']
  #allocation3 [shape = 'f32[4,32]{1,0:T(4,128)}', space=vmem, size = 0x800, scoped, tag = 'scratch operand']
  %s0 = inlined_call_operand.vmem [shape: f32[8,32], index: 0, kind: input, shape index: {}]
  %s1 = inlined_call_operand.vmem [shape: f32[32,32], index: 1, kind: input, shape index: {}]
  %s2 = inlined_call_operand.vmem [shape: f32[32,32], index: 2, kind: input, shape index: {}]
  %s3 = inlined_call_operand.vmem [shape: f32[1,32], index: 3, kind: input, shape index: {}]
  %s4 = inlined_call_operand.vmem [shape: f32[7,32], index: 4, kind: input, shape index: {}]
  %s5 = inlined_call_operand.vmem [shape: f32[28,32], index: 5, kind: input, shape index: {}]
  %s6 = inlined_call_operand.vmem [shape: f32[7,32], index: 6, kind: output, shape index: {0}]
  %s7 = inlined_call_operand.hbm [shape: f32[1,1], index: 7, kind: output, shape index: {1}]
  %8 = xla_tuple %s6, %s7
  %s9 = sld [smem:[#allocation0]]
  $region42: #{renn_forward.1} parent=0
    _
  %s11 = ssub.s32 1, %s9
  %s12 = scalar_select 0, %s11, %s9
  $region1: #{renn_forward.1} parent=0
    #allocation4 [shape = 'u8[512]{0}', space=vmem, size = 0x400, scoped, tag = 'output window, operand 1, single buffered']
    #allocation5 [shape = 's32[1]{0}', space=sflag, size = 0x4, scoped, tag = 'scoped memory for renn_forward.1']
    %13 = vsyncpa [#allocation5], 0
    // Predicated region
    $region2: #{renn_forward.1} parent=1 // pred_check
      _
    $region3: #{renn_forward.1} parent=1 // pred_check_branch
      %15 = sbr.rel (0) target = $region5
    $region4: #{renn_forward.1} parent=1 // pred_region
      _
    $region5: #{renn_forward.1} parent=1 // pred_fallthru
      _
    // Predicated region
    $region6: #{renn_forward.1} parent=1 // pred_check
      _
    $region7: #{renn_forward.1} parent=1 // pred_check_branch
      %17 = sbr.rel (0) target = $region9
    $region8: #{renn_forward.1} parent=1 // pred_region
      _
    $region9: #{renn_forward.1} parent=1 // pred_fallthru
      _
    // Predicated region
    $region10: #{renn_forward.1} parent=1 // pred_check
      _
    $region11: #{renn_forward.1} parent=1 // pred_check_branch
      %19 = sbr.rel (0) target = $region13
    $region12: #{renn_forward.1} parent=1 // pred_region
      _
    $region13: #{renn_forward.1} parent=1 // pred_fallthru
      _
    // Predicated region
    $region14: #{renn_forward.1} parent=1 // pred_check
      _
    $region15: #{renn_forward.1} parent=1 // pred_check_branch
      %21 = sbr.rel (0) target = $region17
    $region16: #{renn_forward.1} parent=1 // pred_region
      _
    $region17: #{renn_forward.1} parent=1 // pred_fallthru
      _
    // Predicated region
    $region18: #{renn_forward.1} parent=1 // pred_check
      _
    $region19: #{renn_forward.1} parent=1 // pred_check_branch
      %23 = sbr.rel (0) target = $region21
    $region20: #{renn_forward.1} parent=1 // pred_region
      _
    $region21: #{renn_forward.1} parent=1 // pred_fallthru
      _
    // Predicated region
    $region22: #{renn_forward.1} parent=1 // pred_check
      _
    $region23: #{renn_forward.1} parent=1 // pred_check_branch
      %25 = sbr.rel (0) target = $region25
    $region24: #{renn_forward.1} parent=1 // pred_region
      _
    $region25: #{renn_forward.1} parent=1 // pred_fallthru
      _
    %v26 = vld [vmem:[%s1] sm:$0xff]
    %v27 = vld [vmem:[%s1 + $0x8] sm:$0xff]
    %v28 = vld [vmem:[%s1 + $0x10] sm:$0xff]
    %v29 = vld [vmem:[%s1 + $0x18] sm:$0xff]
    %v30 = vld [vmem:[%s2] sm:$0xff]
    %v31 = vld [vmem:[%s2 + $0x8] sm:$0xff]
    %v32 = vld [vmem:[%s2 + $0x10] sm:$0xff]
    %v33 = vld [vmem:[%s2 + $0x18] sm:$0xff]
    %v34 = vld [vmem:[%s3] sm:$0x1]
    %v35 = vld [vmem:[%s4] sm:$0x7f]
    %v36 = vld [vmem:[%s5] sm:$0xff]
    %v37 = vld [vmem:[%s5 + $0x8] sm:$0xff]
    %v38 = vld [vmem:[%s5 + $0x10] sm:$0xff]
    %v39 = vld [vmem:[%s5 + $0x18] sm:$0xf]
    %v40 = vld [vmem:[%s0] sm:$0xff]
    %vm41 = vcmask 253952
    %42 = vst.msk [vmem:[#allocation2] sm:$0x1] %vm41, %v40
    %vm43 = vcmask 254977
    %44 = vst.msk [vmem:[#allocation3 - $0x1] sm:$0x2] %vm43, %v40
    %vm45 = vcmask 256002
    %46 = vst.msk [vmem:[#allocation2 - $0x1] sm:$0x4] %vm45, %v40
    %vm47 = vcmask 257027
    %48 = vst.msk [vmem:[#allocation3 - $0x2] sm:$0x8] %vm47, %v40
    %vm49 = vcmask 258052
    %50 = vst.msk [vmem:[#allocation2 - $0x2] sm:$0x10] %vm49, %v40
    %vm51 = vcmask 259077
    %52 = vst.msk [vmem:[#allocation3 - $0x3] sm:$0x20] %vm51, %v40
    %vm53 = vcmask 260102
    %54 = vst.msk [vmem:[#allocation2 - $0x3] sm:$0x40] %vm53, %v40
    %vm55 = vcmask 261127
    %56 = vst.msk [vmem:[#allocation3 - $0x4] sm:$0x80] %vm55, %v40
    %v57 = vld [vmem:[#allocation2] sm:$0xf]
    %v58 = vld [vmem:[#allocation3] sm:$0xf]
    %vm59 = vcmask 261120
    %v61 = vsel %vm59, %v58, 0
    %63 = vmatprep.subr.mxu0 0.0
    %64 = vmatpush1.msra.mxu0 0.0
    %65 = vmatprep.subr.mxu0 0.0
    %66 = vmatpush1.msra.mxu0 0.0
    %67 = vmatprep.subr.mxu0 0.0
    %68 = vmatpush1.msra.mxu0 0.0
    %69 = vmatprep.subr.mxu0 0.0
    %70 = vmatpush1.msra.mxu0 0.0
    %71 = vmatprep.subr.mxu0 0.0
    %72 = vmatpush1.msra.mxu0 0.0
    %73 = vmatprep.subr.mxu0 0.0
    %74 = vmatpush1.msra.mxu0 0.0
    %75 = vmatprep.subr.mxu0 0.0
    %76 = vmatpush1.msra.mxu0 0.0
    %77 = vmatprep.subr.mxu0 0.0
    %78 = vmatpush1.msra.mxu0 0.0
    %79 = vmatprep.subr.mxu0 0.0
    %80 = vmatpush1.msra.mxu0 0.0
    %81 = vmatprep.subr.mxu0 0.0
    %82 = vmatpush1.msra.mxu0 0.0
    %83 = vmatprep.subr.mxu0 0.0
    %84 = vmatpush1.msra.mxu0 0.0
    %85 = vmatprep.subr.mxu0 0.0
    %86 = vmatpush1.msra.mxu0 0.0
    %87 = vmatprep.subr.mxu0 0.0
    %88 = vmatpush1.msra.mxu0 %v33
    %89 = vmatprep.subr.mxu0 0.0
    %90 = vmatpush1.msra.mxu0 %v32
    %91 = vmatprep.subr.mxu0 0.0
    %92 = vmatpush1.msra.mxu0 %v31
    %93 = vmatprep.subr.mxu0 0.0
    %94 = vmatpush1.msra.mxu0 %v30
    %95 = vmatprep.subr.mxu0 0.0
    %96 = vmatpush2.msra.mxu0 0.0
    %97 = vmatprep.subr.mxu0 0.0
    %98 = vmatpush2.msra.mxu0 0.0
    %99 = vmatprep.subr.mxu0 0.0
    %100 = vmatpush2.msra.mxu0 0.0
    %101 = vmatprep.subr.mxu0 0.0
    %102 = vmatpush2.msra.mxu0 0.0
    %103 = vmatprep.subr.mxu0 0.0
    %104 = vmatpush2.msra.mxu0 0.0
    %105 = vmatprep.subr.mxu0 0.0
    %106 = vmatpush2.msra.mxu0 0.0
    %107 = vmatprep.subr.mxu0 0.0
    %108 = vmatpush2.msra.mxu0 0.0
    %109 = vmatprep.subr.mxu0 0.0
    %110 = vmatpush2.msra.mxu0 0.0
    %111 = vmatprep.subr.mxu0 0.0
    %112 = vmatpush2.msra.mxu0 0.0
    %113 = vmatprep.subr.mxu0 0.0
    %114 = vmatpush2.msra.mxu0 0.0
    %115 = vmatprep.subr.mxu0 0.0
    %116 = vmatpush2.msra.mxu0 0.0
    %117 = vmatprep.subr.mxu0 0.0
    %118 = vmatpush2.msra.mxu0 0.0
    %119 = vmatprep.subr.mxu0 0.0
    %120 = vmatpush2.msra.mxu0 0.0
    %121 = vmatprep.subr.mxu0 0.0
    %122 = vmatpush2.msra.mxu0 0.0
    %123 = vmatprep.subr.mxu0 0.0
    %124 = vmatpush2.msra.mxu0 0.0
    %125 = vmatprep.subr.mxu0 0.0
    %126 = vmatpush2.msra.mxu0 0.0
    %127 = vmatprep.mubr.f32.mxu0 0.0
    %128 = vmatmul.mubr.f32.gmra.mxu0 %v61
    %v129 = vpop.f32.mrf.mxu0
    %v130 = vadd.f32 0.0, %v129
    %v131 = vpop.f32.mrf.mxu0
    %132 = vdwg.mxu0
    %v134 = vsel %vm59, %v57, 0
    %136 = vmatprep.subr.mxu0 0.0
    %137 = vmatpush1.msra.mxu0 0.0
    %138 = vmatprep.subr.mxu0 0.0
    %139 = vmatpush1.msra.mxu0 0.0
    %140 = vmatprep.subr.mxu0 0.0
    %141 = vmatpush1.msra.mxu0 0.0
    %142 = vmatprep.subr.mxu0 0.0
    %143 = vmatpush1.msra.mxu0 0.0
    %144 = vmatprep.subr.mxu0 0.0
    %145 = vmatpush1.msra.mxu0 0.0
    %146 = vmatprep.subr.mxu0 0.0
    %147 = vmatpush1.msra.mxu0 0.0
    %148 = vmatprep.subr.mxu0 0.0
    %149 = vmatpush1.msra.mxu0 0.0
    %150 = vmatprep.subr.mxu0 0.0
    %151 = vmatpush1.msra.mxu0 0.0
    %152 = vmatprep.subr.mxu0 0.0
    %153 = vmatpush1.msra.mxu0 0.0
    %154 = vmatprep.subr.mxu0 0.0
    %155 = vmatpush1.msra.mxu0 0.0
    %156 = vmatprep.subr.mxu0 0.0
    %157 = vmatpush1.msra.mxu0 0.0
    %158 = vmatprep.subr.mxu0 0.0
    %159 = vmatpush1.msra.mxu0 0.0
    %160 = vmatprep.subr.mxu0 0.0
    %161 = vmatpush1.msra.mxu0 %v29
    %162 = vmatprep.subr.mxu0 0.0
    %163 = vmatpush1.msra.mxu0 %v28
    %164 = vmatprep.subr.mxu0 0.0
    %165 = vmatpush1.msra.mxu0 %v27
    %166 = vmatprep.subr.mxu0 0.0
    %167 = vmatpush1.msra.mxu0 %v26
    %168 = vmatprep.subr.mxu0 0.0
    %169 = vmatpush2.msra.mxu0 0.0
    %170 = vmatprep.subr.mxu0 0.0
    %171 = vmatpush2.msra.mxu0 0.0
    %172 = vmatprep.subr.mxu0 0.0
    %173 = vmatpush2.msra.mxu0 0.0
    %174 = vmatprep.subr.mxu0 0.0
    %175 = vmatpush2.msra.mxu0 0.0
    %176 = vmatprep.subr.mxu0 0.0
    %177 = vmatpush2.msra.mxu0 0.0
    %178 = vmatprep.subr.mxu0 0.0
    %179 = vmatpush2.msra.mxu0 0.0
    %180 = vmatprep.subr.mxu0 0.0
    %181 = vmatpush2.msra.mxu0 0.0
    %182 = vmatprep.subr.mxu0 0.0
    %183 = vmatpush2.msra.mxu0 0.0
    %184 = vmatprep.subr.mxu0 0.0
    %185 = vmatpush2.msra.mxu0 0.0
    %186 = vmatprep.subr.mxu0 0.0
    %187 = vmatpush2.msra.mxu0 0.0
    %188 = vmatprep.subr.mxu0 0.0
    %189 = vmatpush2.msra.mxu0 0.0
    %190 = vmatprep.subr.mxu0 0.0
    %191 = vmatpush2.msra.mxu0 0.0
    %192 = vmatprep.subr.mxu0 0.0
    %193 = vmatpush2.msra.mxu0 0.0
    %194 = vmatprep.subr.mxu0 0.0
    %195 = vmatpush2.msra.mxu0 0.0
    %196 = vmatprep.subr.mxu0 0.0
    %197 = vmatpush2.msra.mxu0 0.0
    %198 = vmatprep.subr.mxu0 0.0
    %199 = vmatpush2.msra.mxu0 0.0
    %200 = vmatprep.mubr.f32.mxu0 0.0
    %201 = vmatmul.mubr.f32.gmra.mxu0 %v134
    %v202 = vpop.f32.mrf.mxu0
    %v203 = vadd.f32 %v130, %v202
    %v204 = vpop.f32.mrf.mxu0
    %205 = vdwg.mxu0
    %v207 = vlaneseq
    %v208 = vshrl.u32 %v207, 7
    %v209 = vsub.s32 0, %v208
    %v210 = vrot.slane %v34, %v209
    %v212 = vadd.f32 %v203, %v210
    %v213 = vmul.f32 %v212, %v35
    %vm214 = vcmask 257024
    %v215 = vsel %vm214, %v213, 0.0
    %216 = vadd.xlane.f32.xlu0 %v215
    %v217 = vpop.xlane.xlu0 %216
    %v218 = vxor.u32 %v217, 2147483648
    %v219 = vmul.f32 %v218, 1.442695
    %v220 = vpow.pop %v219
    %v221 = vadd.f32 %v220, 1.0
    %v222 = vrcp.pop %v221
    %v223 = vmul.f32 1.0, %v222
    %v224 = vmul.f32 %v212, %v36
    %v225 = vsel %vm214, %v224, 0.0
    %226 = vadd.xlane.f32.xlu0 %v225
    %v227 = vpop.xlane.xlu0 %226
    %v228 = vxor.u32 %v227, 2147483648
    %v229 = vmul.f32 %v228, 1.442695
    %v230 = vpow.pop %v229
    %v231 = vadd.f32 %v230, 1.0
    %v232 = vrcp.pop %v231
    %v233 = vmul.f32 1.0, %v232
    %v234 = vadd.f32 %v223, %v233
    %vm237 = vcmask 1040384
    %v238 = vrot.slane %v36, 7
    %v239 = vrot.slane %v37, 7
    %v240 = vsel %vm237, %v238, %v239
    %v242 = vmul.f32 %v212, %v240
    %v243 = vsel %vm214, %v242, 0.0
    %244 = vadd.xlane.f32.xlu0 %v243
    %v245 = vpop.xlane.xlu0 %244
    %v246 = vxor.u32 %v245, 2147483648
    %v247 = vmul.f32 %v246, 1.442695
    %v248 = vpow.pop %v247
    %v249 = vadd.f32 %v248, 1.0
    %v250 = vrcp.pop %v249
    %v251 = vmul.f32 1.0, %v250
    %v252 = vadd.f32 %v234, %v251
    %vm254 = vcmask 1041408
    %v255 = vrot.slane %v37, 6
    %v256 = vrot.slane %v38, 6
    %v257 = vsel %vm254, %v255, %v256
    %v259 = vmul.f32 %v212, %v257
    %v260 = vsel %vm214, %v259, 0.0
    %261 = vadd.xlane.f32.xlu0 %v260
    %v262 = vpop.xlane.xlu0 %261
    %v263 = vxor.u32 %v262, 2147483648
    %v264 = vmul.f32 %v263, 1.442695
    %v265 = vpow.pop %v264
    %v266 = vadd.f32 %v265, 1.0
    %v267 = vrcp.pop %v266
    %v268 = vmul.f32 1.0, %v267
    %v269 = vadd.f32 %v252, %v268
    %vm271 = vcmask 1042432
    %v272 = vrot.slane %v38, 5
    %v273 = vrot.slane %v39, 5
    %v274 = vsel %vm271, %v272, %v273
    %v276 = vmul.f32 %v212, %v274
    %v277 = vsel %vm214, %v276, 0.0
    %278 = vadd.xlane.f32.xlu0 %v277
    %v279 = vpop.xlane.xlu0 %278
    %v280 = vxor.u32 %v279, 2147483648
    %v281 = vmul.f32 %v280, 1.442695
    %v282 = vpow.pop %v281
    %v283 = vadd.f32 %v282, 1.0
    %v284 = vrcp.pop %v283
    %v285 = vmul.f32 1.0, %v284
    %v286 = vadd.f32 %v269, %v285
    %vm287 = vcmask 1043456
    %v288 = vsel %vm287, %v286, 0.0
    %v289 = vrot.slane %v288, 4
    %v290 = vadd.f32 %v288, %v289
    %v291 = vrot.slane %v290, 2
    %v292 = vadd.f32 %v290, %v291
    %v293 = vrot.slane %v292, 1
    %v294 = vadd.f32 %v292, %v293
    %v295 = vadd.f32 %v294, 0.0
    %296 = vst.msk [vmem:[%s6] sm:$0xf] %vm214, %v212
    %297 = vst.msk [vmem:[#allocation2] sm:$0x1] %vm41, %v212
    %298 = vst.msk [vmem:[#allocation3 - $0x1] sm:$0x2] %vm43, %v212
    %299 = vst.msk [vmem:[#allocation2 - $0x1] sm:$0x4] %vm45, %v212
    %300 = vst.msk [vmem:[#allocation3 - $0x2] sm:$0x8] %vm47, %v212
    %v301 = vld [vmem:[#allocation2] sm:$0x3]
    %v302 = vld [vmem:[#allocation3] sm:$0x3]
    %v304 = vsel %vm59, %v302, 0
    %306 = vmatprep.subr.mxu0 0.0
    %307 = vmatpush1.msra.mxu0 0.0
    %308 = vmatprep.subr.mxu0 0.0
    %309 = vmatpush1.msra.mxu0 0.0
    %310 = vmatprep.subr.mxu0 0.0
    %311 = vmatpush1.msra.mxu0 0.0
    %312 = vmatprep.subr.mxu0 0.0
    %313 = vmatpush1.msra.mxu0 0.0
    %314 = vmatprep.subr.mxu0 0.0
    %315 = vmatpush1.msra.mxu0 0.0
    %316 = vmatprep.subr.mxu0 0.0
    %317 = vmatpush1.msra.mxu0 0.0
    %318 = vmatprep.subr.mxu0 0.0
    %319 = vmatpush1.msra.mxu0 0.0
    %320 = vmatprep.subr.mxu0 0.0
    %321 = vmatpush1.msra.mxu0 0.0
    %322 = vmatprep.subr.mxu0 0.0
    %323 = vmatpush1.msra.mxu0 0.0
    %324 = vmatprep.subr.mxu0 0.0
    %325 = vmatpush1.msra.mxu0 0.0
    %326 = vmatprep.subr.mxu0 0.0
    %327 = vmatpush1.msra.mxu0 0.0
    %328 = vmatprep.subr.mxu0 0.0
    %329 = vmatpush1.msra.mxu0 0.0
    %330 = vmatprep.subr.mxu0 0.0
    %331 = vmatpush1.msra.mxu0 %v33
    %332 = vmatprep.subr.mxu0 0.0
    %333 = vmatpush1.msra.mxu0 %v32
    %334 = vmatprep.subr.mxu0 0.0
    %335 = vmatpush1.msra.mxu0 %v31
    %336 = vmatprep.subr.mxu0 0.0
    %337 = vmatpush1.msra.mxu0 %v30
    %338 = vmatprep.subr.mxu0 0.0
    %339 = vmatpush2.msra.mxu0 0.0
    %340 = vmatprep.subr.mxu0 0.0
    %341 = vmatpush2.msra.mxu0 0.0
    %342 = vmatprep.subr.mxu0 0.0
    %343 = vmatpush2.msra.mxu0 0.0
    %344 = vmatprep.subr.mxu0 0.0
    %345 = vmatpush2.msra.mxu0 0.0
    %346 = vmatprep.subr.mxu0 0.0
    %347 = vmatpush2.msra.mxu0 0.0
    %348 = vmatprep.subr.mxu0 0.0
    %349 = vmatpush2.msra.mxu0 0.0
    %350 = vmatprep.subr.mxu0 0.0
    %351 = vmatpush2.msra.mxu0 0.0
    %352 = vmatprep.subr.mxu0 0.0
    %353 = vmatpush2.msra.mxu0 0.0
    %354 = vmatprep.subr.mxu0 0.0
    %355 = vmatpush2.msra.mxu0 0.0
    %356 = vmatprep.subr.mxu0 0.0
    %357 = vmatpush2.msra.mxu0 0.0
    %358 = vmatprep.subr.mxu0 0.0
    %359 = vmatpush2.msra.mxu0 0.0
    %360 = vmatprep.subr.mxu0 0.0
    %361 = vmatpush2.msra.mxu0 0.0
    %362 = vmatprep.subr.mxu0 0.0
    %363 = vmatpush2.msra.mxu0 0.0
    %364 = vmatprep.subr.mxu0 0.0
    %365 = vmatpush2.msra.mxu0 0.0
    %366 = vmatprep.subr.mxu0 0.0
    %367 = vmatpush2.msra.mxu0 0.0
    %368 = vmatprep.subr.mxu0 0.0
    %369 = vmatpush2.msra.mxu0 0.0
    %370 = vmatprep.mubr.f32.mxu0 0.0
    %371 = vmatmul.mubr.f32.gmra.mxu0 %v304
    %v372 = vpop.f32.mrf.mxu0
    %v373 = vadd.f32 0.0, %v372
    %v374 = vpop.f32.mrf.mxu0
    %375 = vdwg.mxu0
    %v377 = vsel %vm59, %v301, 0
    %379 = vmatprep.subr.mxu0 0.0
    %380 = vmatpush1.msra.mxu0 0.0
    %381 = vmatprep.subr.mxu0 0.0
    %382 = vmatpush1.msra.mxu0 0.0
    %383 = vmatprep.subr.mxu0 0.0
    %384 = vmatpush1.msra.mxu0 0.0
    %385 = vmatprep.subr.mxu0 0.0
    %386 = vmatpush1.msra.mxu0 0.0
    %387 = vmatprep.subr.mxu0 0.0
    %388 = vmatpush1.msra.mxu0 0.0
    %389 = vmatprep.subr.mxu0 0.0
    %390 = vmatpush1.msra.mxu0 0.0
    %391 = vmatprep.subr.mxu0 0.0
    %392 = vmatpush1.msra.mxu0 0.0
    %393 = vmatprep.subr.mxu0 0.0
    %394 = vmatpush1.msra.mxu0 0.0
    %395 = vmatprep.subr.mxu0 0.0
    %396 = vmatpush1.msra.mxu0 0.0
    %397 = vmatprep.subr.mxu0 0.0
    %398 = vmatpush1.msra.mxu0 0.0
    %399 = vmatprep.subr.mxu0 0.0
    %400 = vmatpush1.msra.mxu0 0.0
    %401 = vmatprep.subr.mxu0 0.0
    %402 = vmatpush1.msra.mxu0 0.0
    %403 = vmatprep.subr.mxu0 0.0
    %404 = vmatpush1.msra.mxu0 %v29
    %405 = vmatprep.subr.mxu0 0.0
    %406 = vmatpush1.msra.mxu0 %v28
    %407 = vmatprep.subr.mxu0 0.0
    %408 = vmatpush1.msra.mxu0 %v27
    %409 = vmatprep.subr.mxu0 0.0
    %410 = vmatpush1.msra.mxu0 %v26
    %411 = vmatprep.subr.mxu0 0.0
    %412 = vmatpush2.msra.mxu0 0.0
    %413 = vmatprep.subr.mxu0 0.0
    %414 = vmatpush2.msra.mxu0 0.0
    %415 = vmatprep.subr.mxu0 0.0
    %416 = vmatpush2.msra.mxu0 0.0
    %417 = vmatprep.subr.mxu0 0.0
    %418 = vmatpush2.msra.mxu0 0.0
    %419 = vmatprep.subr.mxu0 0.0
    %420 = vmatpush2.msra.mxu0 0.0
    %421 = vmatprep.subr.mxu0 0.0
    %422 = vmatpush2.msra.mxu0 0.0
    %423 = vmatprep.subr.mxu0 0.0
    %424 = vmatpush2.msra.mxu0 0.0
    %425 = vmatprep.subr.mxu0 0.0
    %426 = vmatpush2.msra.mxu0 0.0
    %427 = vmatprep.subr.mxu0 0.0
    %428 = vmatpush2.msra.mxu0 0.0
    %429 = vmatprep.subr.mxu0 0.0
    %430 = vmatpush2.msra.mxu0 0.0
    %431 = vmatprep.subr.mxu0 0.0
    %432 = vmatpush2.msra.mxu0 0.0
    %433 = vmatprep.subr.mxu0 0.0
    %434 = vmatpush2.msra.mxu0 0.0
    %435 = vmatprep.subr.mxu0 0.0
    %436 = vmatpush2.msra.mxu0 0.0
    %437 = vmatprep.subr.mxu0 0.0
    %438 = vmatpush2.msra.mxu0 0.0
    %439 = vmatprep.subr.mxu0 0.0
    %440 = vmatpush2.msra.mxu0 0.0
    %441 = vmatprep.subr.mxu0 0.0
    %442 = vmatpush2.msra.mxu0 0.0
    %443 = vmatprep.mubr.f32.mxu0 0.0
    %444 = vmatmul.mubr.f32.gmra.mxu0 %v377
    %v445 = vpop.f32.mrf.mxu0
    %v446 = vadd.f32 %v373, %v445
    %v447 = vpop.f32.mrf.mxu0
    %448 = vdwg.mxu0
    %v449 = vadd.f32 %v446, %v210
    %v451 = vrot.slane %v35, 4
    %v453 = vmul.f32 %v449, %v451
    %vm454 = vcmask 254976
    %v455 = vsel %vm454, %v453, 0.0
    %456 = vadd.xlane.f32.xlu0 %v455
    %v457 = vpop.xlane.xlu0 %456
    %v458 = vxor.u32 %v457, 2147483648
    %v459 = vmul.f32 %v458, 1.442695
    %v460 = vpow.pop %v459
    %v461 = vadd.f32 %v460, 1.0
    %v462 = vrcp.pop %v461
    %v463 = vmul.f32 1.0, %v462
    %v464 = vrot.slane %v36, 4
    %v466 = vmul.f32 %v449, %v464
    %v467 = vsel %vm454, %v466, 0.0
    %468 = vadd.xlane.f32.xlu0 %v467
    %v469 = vpop.xlane.xlu0 %468
    %v470 = vxor.u32 %v469, 2147483648
    %v471 = vmul.f32 %v470, 1.442695
    %v472 = vpow.pop %v471
    %v473 = vadd.f32 %v472, 1.0
    %v474 = vrcp.pop %v473
    %v475 = vmul.f32 1.0, %v474
    %v476 = vadd.f32 %v463, %v475
    %v477 = vrot.slane %v37, 3
    %v479 = vmul.f32 %v449, %v477
    %v480 = vsel %vm454, %v479, 0.0
    %481 = vadd.xlane.f32.xlu0 %v480
    %v482 = vpop.xlane.xlu0 %481
    %v483 = vxor.u32 %v482, 2147483648
    %v484 = vmul.f32 %v483, 1.442695
    %v485 = vpow.pop %v484
    %v486 = vadd.f32 %v485, 1.0
    %v487 = vrcp.pop %v486
    %v488 = vmul.f32 1.0, %v487
    %v489 = vadd.f32 %v476, %v488
    %v490 = vrot.slane %v38, 2
    %v492 = vmul.f32 %v449, %v490
    %v493 = vsel %vm454, %v492, 0.0
    %494 = vadd.xlane.f32.xlu0 %v493
    %v495 = vpop.xlane.xlu0 %494
    %v496 = vxor.u32 %v495, 2147483648
    %v497 = vmul.f32 %v496, 1.442695
    %v498 = vpow.pop %v497
    %v499 = vadd.f32 %v498, 1.0
    %v500 = vrcp.pop %v499
    %v501 = vmul.f32 1.0, %v500
    %v502 = vadd.f32 %v489, %v501
    %v503 = vrot.slane %v39, 1
    %v505 = vmul.f32 %v449, %v503
    %v506 = vsel %vm454, %v505, 0.0
    %507 = vadd.xlane.f32.xlu0 %v506
    %v508 = vpop.xlane.xlu0 %507
    %v509 = vxor.u32 %v508, 2147483648
    %v510 = vmul.f32 %v509, 1.442695
    %v511 = vpow.pop %v510
    %v512 = vadd.f32 %v511, 1.0
    %v513 = vrcp.pop %v512
    %v514 = vmul.f32 1.0, %v513
    %v515 = vadd.f32 %v502, %v514
    %v516 = vsel %vm254, %v515, 0.0
    %v517 = vrot.slane %v516, 4
    %v518 = vadd.f32 %v516, %v517
    %v519 = vrot.slane %v518, 2
    %v520 = vadd.f32 %v518, %v519
    %v521 = vrot.slane %v520, 1
    %v522 = vadd.f32 %v520, %v521
    %v523 = vadd.f32 %v295, %v522
    %524 = vst.msk [vmem:[%s6 + $0x4] sm:$0x3] %vm454, %v449
    %525 = vst.msk [vmem:[#allocation2] sm:$0x1] %vm41, %v449
    %526 = vst.msk [vmem:[#allocation3 - $0x1] sm:$0x2] %vm43, %v449
    %v527 = vld [vmem:[#allocation2] sm:$0x1]
    %v528 = vld [vmem:[#allocation3] sm:$0x1]
    %v530 = vsel %vm59, %v528, 0
    %532 = vmatprep.subr.mxu0 0.0
    %533 = vmatpush1.msra.mxu0 0.0
    %534 = vmatprep.subr.mxu0 0.0
    %535 = vmatpush1.msra.mxu0 0.0
    %536 = vmatprep.subr.mxu0 0.0
    %537 = vmatpush1.msra.mxu0 0.0
    %538 = vmatprep.subr.mxu0 0.0
    %539 = vmatpush1.msra.mxu0 0.0
    %540 = vmatprep.subr.mxu0 0.0
    %541 = vmatpush1.msra.mxu0 0.0
    %542 = vmatprep.subr.mxu0 0.0
    %543 = vmatpush1.msra.mxu0 0.0
    %544 = vmatprep.subr.mxu0 0.0
    %545 = vmatpush1.msra.mxu0 0.0
    %546 = vmatprep.subr.mxu0 0.0
    %547 = vmatpush1.msra.mxu0 0.0
    %548 = vmatprep.subr.mxu0 0.0
    %549 = vmatpush1.msra.mxu0 0.0
    %550 = vmatprep.subr.mxu0 0.0
    %551 = vmatpush1.msra.mxu0 0.0
    %552 = vmatprep.subr.mxu0 0.0
    %553 = vmatpush1.msra.mxu0 0.0
    %554 = vmatprep.subr.mxu0 0.0
    %555 = vmatpush1.msra.mxu0 0.0
    %556 = vmatprep.subr.mxu0 0.0
    %557 = vmatpush1.msra.mxu0 %v33
    %558 = vmatprep.subr.mxu0 0.0
    %559 = vmatpush1.msra.mxu0 %v32
    %560 = vmatprep.subr.mxu0 0.0
    %561 = vmatpush1.msra.mxu0 %v31
    %562 = vmatprep.subr.mxu0 0.0
    %563 = vmatpush1.msra.mxu0 %v30
    %564 = vmatprep.subr.mxu0 0.0
    %565 = vmatpush2.msra.mxu0 0.0
    %566 = vmatprep.subr.mxu0 0.0
    %567 = vmatpush2.msra.mxu0 0.0
    %568 = vmatprep.subr.mxu0 0.0
    %569 = vmatpush2.msra.mxu0 0.0
    %570 = vmatprep.subr.mxu0 0.0
    %571 = vmatpush2.msra.mxu0 0.0
    %572 = vmatprep.subr.mxu0 0.0
    %573 = vmatpush2.msra.mxu0 0.0
    %574 = vmatprep.subr.mxu0 0.0
    %575 = vmatpush2.msra.mxu0 0.0
    %576 = vmatprep.subr.mxu0 0.0
    %577 = vmatpush2.msra.mxu0 0.0
    %578 = vmatprep.subr.mxu0 0.0
    %579 = vmatpush2.msra.mxu0 0.0
    %580 = vmatprep.subr.mxu0 0.0
    %581 = vmatpush2.msra.mxu0 0.0
    %582 = vmatprep.subr.mxu0 0.0
    %583 = vmatpush2.msra.mxu0 0.0
    %584 = vmatprep.subr.mxu0 0.0
    %585 = vmatpush2.msra.mxu0 0.0
    %586 = vmatprep.subr.mxu0 0.0
    %587 = vmatpush2.msra.mxu0 0.0
    %588 = vmatprep.subr.mxu0 0.0
    %589 = vmatpush2.msra.mxu0 0.0
    %590 = vmatprep.subr.mxu0 0.0
    %591 = vmatpush2.msra.mxu0 0.0
    %592 = vmatprep.subr.mxu0 0.0
    %593 = vmatpush2.msra.mxu0 0.0
    %594 = vmatprep.subr.mxu0 0.0
    %595 = vmatpush2.msra.mxu0 0.0
    %596 = vmatprep.mubr.f32.mxu0 0.0
    %597 = vmatmul.mubr.f32.gmra.mxu0 %v530
    %v598 = vpop.f32.mrf.mxu0
    %v599 = vadd.f32 0.0, %v598
    %v600 = vpop.f32.mrf.mxu0
    %601 = vdwg.mxu0
    %v603 = vsel %vm59, %v527, 0
    %605 = vmatprep.subr.mxu0 0.0
    %606 = vmatpush1.msra.mxu0 0.0
    %607 = vmatprep.subr.mxu0 0.0
    %608 = vmatpush1.msra.mxu0 0.0
    %609 = vmatprep.subr.mxu0 0.0
    %610 = vmatpush1.msra.mxu0 0.0
    %611 = vmatprep.subr.mxu0 0.0
    %612 = vmatpush1.msra.mxu0 0.0
    %613 = vmatprep.subr.mxu0 0.0
    %614 = vmatpush1.msra.mxu0 0.0
    %615 = vmatprep.subr.mxu0 0.0
    %616 = vmatpush1.msra.mxu0 0.0
    %617 = vmatprep.subr.mxu0 0.0
    %618 = vmatpush1.msra.mxu0 0.0
    %619 = vmatprep.subr.mxu0 0.0
    %620 = vmatpush1.msra.mxu0 0.0
    %621 = vmatprep.subr.mxu0 0.0
    %622 = vmatpush1.msra.mxu0 0.0
    %623 = vmatprep.subr.mxu0 0.0
    %624 = vmatpush1.msra.mxu0 0.0
    %625 = vmatprep.subr.mxu0 0.0
    %626 = vmatpush1.msra.mxu0 0.0
    %627 = vmatprep.subr.mxu0 0.0
    %628 = vmatpush1.msra.mxu0 0.0
    %629 = vmatprep.subr.mxu0 0.0
    %630 = vmatpush1.msra.mxu0 %v29
    %631 = vmatprep.subr.mxu0 0.0
    %632 = vmatpush1.msra.mxu0 %v28
    %633 = vmatprep.subr.mxu0 0.0
    %634 = vmatpush1.msra.mxu0 %v27
    %635 = vmatprep.subr.mxu0 0.0
    %636 = vmatpush1.msra.mxu0 %v26
    %637 = vmatprep.subr.mxu0 0.0
    %638 = vmatpush2.msra.mxu0 0.0
    %639 = vmatprep.subr.mxu0 0.0
    %640 = vmatpush2.msra.mxu0 0.0
    %641 = vmatprep.subr.mxu0 0.0
    %642 = vmatpush2.msra.mxu0 0.0
    %643 = vmatprep.subr.mxu0 0.0
    %644 = vmatpush2.msra.mxu0 0.0
    %645 = vmatprep.subr.mxu0 0.0
    %646 = vmatpush2.msra.mxu0 0.0
    %647 = vmatprep.subr.mxu0 0.0
    %648 = vmatpush2.msra.mxu0 0.0
    %649 = vmatprep.subr.mxu0 0.0
    %650 = vmatpush2.msra.mxu0 0.0
    %651 = vmatprep.subr.mxu0 0.0
    %652 = vmatpush2.msra.mxu0 0.0
    %653 = vmatprep.subr.mxu0 0.0
    %654 = vmatpush2.msra.mxu0 0.0
    %655 = vmatprep.subr.mxu0 0.0
    %656 = vmatpush2.msra.mxu0 0.0
    %657 = vmatprep.subr.mxu0 0.0
    %658 = vmatpush2.msra.mxu0 0.0
    %659 = vmatprep.subr.mxu0 0.0
    %660 = vmatpush2.msra.mxu0 0.0
    %661 = vmatprep.subr.mxu0 0.0
    %662 = vmatpush2.msra.mxu0 0.0
    %663 = vmatprep.subr.mxu0 0.0
    %664 = vmatpush2.msra.mxu0 0.0
    %665 = vmatprep.subr.mxu0 0.0
    %666 = vmatpush2.msra.mxu0 0.0
    %667 = vmatprep.subr.mxu0 0.0
    %668 = vmatpush2.msra.mxu0 0.0
    %669 = vmatprep.mubr.f32.mxu0 0.0
    %670 = vmatmul.mubr.f32.gmra.mxu0 %v603
    %v671 = vpop.f32.mrf.mxu0
    %v672 = vadd.f32 %v599, %v671
    %v673 = vpop.f32.mrf.mxu0
    %674 = vdwg.mxu0
    %v675 = vadd.f32 %v672, %v34
    %v676 = vrot.slane %v35, 6
    %v678 = vmul.f32 %v675, %v676
    %v679 = vsel %vm41, %v678, 0.0
    %680 = vadd.xlane.f32.xlu0 %v679
    %v681 = vpop.xlane.xlu0 %680
    %v682 = vxor.u32 %v681, 2147483648
    %v683 = vmul.f32 %v682, 1.442695
    %v684 = vpow.pop %v683
    %v685 = vadd.f32 %v684, 1.0
    %v686 = vrcp.pop %v685
    %v687 = vmul.f32 1.0, %v686
    %v688 = vrot.slane %v36, 6
    %v690 = vmul.f32 %v675, %v688
    %v691 = vsel %vm41, %v690, 0.0
    %692 = vadd.xlane.f32.xlu0 %v691
    %v693 = vpop.xlane.xlu0 %692
    %v694 = vxor.u32 %v693, 2147483648
    %v695 = vmul.f32 %v694, 1.442695
    %v696 = vpow.pop %v695
    %v697 = vadd.f32 %v696, 1.0
    %v698 = vrcp.pop %v697
    %v699 = vmul.f32 1.0, %v698
    %v700 = vadd.f32 %v687, %v699
    %v701 = vrot.slane %v37, 5
    %v703 = vmul.f32 %v675, %v701
    %v704 = vsel %vm41, %v703, 0.0
    %705 = vadd.xlane.f32.xlu0 %v704
    %v706 = vpop.xlane.xlu0 %705
    %v707 = vxor.u32 %v706, 2147483648
    %v708 = vmul.f32 %v707, 1.442695
    %v709 = vpow.pop %v708
    %v710 = vadd.f32 %v709, 1.0
    %v711 = vrcp.pop %v710
    %v712 = vmul.f32 1.0, %v711
    %v713 = vadd.f32 %v700, %v712
    %v714 = vrot.slane %v38, 4
    %v716 = vmul.f32 %v675, %v714
    %v717 = vsel %vm41, %v716, 0.0
    %718 = vadd.xlane.f32.xlu0 %v717
    %v719 = vpop.xlane.xlu0 %718
    %v720 = vxor.u32 %v719, 2147483648
    %v721 = vmul.f32 %v720, 1.442695
    %v722 = vpow.pop %v721
    %v723 = vadd.f32 %v722, 1.0
    %v724 = vrcp.pop %v723
    %v725 = vmul.f32 1.0, %v724
    %v726 = vadd.f32 %v713, %v725
    %v727 = vrot.slane %v39, 3
    %v729 = vmul.f32 %v675, %v727
    %v730 = vsel %vm41, %v729, 0.0
    %731 = vadd.xlane.f32.xlu0 %v730
    %v732 = vpop.xlane.xlu0 %731
    %v733 = vxor.u32 %v732, 2147483648
    %v734 = vmul.f32 %v733, 1.442695
    %v735 = vpow.pop %v734
    %v736 = vadd.f32 %v735, 1.0
    %v737 = vrcp.pop %v736
    %v738 = vmul.f32 1.0, %v737
    %v739 = vadd.f32 %v726, %v738
    %v740 = vadd.f32 %v739, 0.0
    %v741 = vadd.f32 %v523, %v740
    %742 = vst.msk [vmem:[%s6 + $0x6] sm:$0x1] %vm41, %v675
    %vm743 = vcmask 0
    %744 = vst.msk [vmem:[#allocation4] sm:$0x1] %vm743, %v741
    // Predicated region
    $region26: #{renn_forward.1} parent=1 // pred_check
      _
    $region27: #{renn_forward.1} parent=1 // pred_check_branch
      %746 = sbr.rel (0) target = $region29
    $region28: #{renn_forward.1} parent=1 // pred_region
      _
    $region29: #{renn_forward.1} parent=1 // pred_fallthru
      _
    // Predicated region
    $region30: #{renn_forward.1} parent=1 // pred_check
      _
    $region31: #{renn_forward.1} parent=1 // pred_check_branch
      %748 = sbr.rel (0) target = $region33
    $region32: #{renn_forward.1} parent=1 // pred_region
      %s750 = ssub.s32 16, 16
      %751 = vsyncadd [#allocation5], %s750
      %s753 = sshll.u32 [#allocation4], 4
      %s754 = int_to_ptr.vmem [resolvable:$true] %s753
      %756 = dma.vmem_to_hbm [thread:$0]  %s754, 16, %s7, [#allocation5]
    $region33: #{renn_forward.1} parent=1 // pred_fallthru
      _
    // Predicated region
    $region34: #{renn_forward.1} parent=1 // pred_check
      _
    $region35: #{renn_forward.1} parent=1 // pred_check_branch
      %758 = sbr.rel (0) target = $region37
    $region36: #{renn_forward.1} parent=1 // pred_region
      _
    $region37: #{renn_forward.1} parent=1 // pred_fallthru
      _
    // Predicated region
    $region38: #{renn_forward.1} parent=1 // pred_check
      _
    $region39: #{renn_forward.1} parent=1 // pred_check_branch
      %760 = sbr.rel (0) target = $region41
    $region40: #{renn_forward.1} parent=1 // pred_region
      %761 = dma.done [#allocation5], 16
    $region41: #{renn_forward.1} parent=1 // pred_fallthru
      _
    %762 = vsyncpa [#allocation5], 1

</llo_original>
